<compile_context>
chip_gen: v7x
topology: tpu7x:2x2x1
jax: 0.10.0
libtpu: 0.0.40
codegen_flags: <defaults>
</compile_context>

<pallas_src>
import jax
import jax.numpy as jnp
from jax.experimental import pallas as pl
from jax.experimental.pallas import tpu as pltpu

LN_EPS = 1e-5
LANE = 128          # lane width: pad output feature dim to a multiple of this
MAX_TILE_B = 512    # batch tile (multiple of 256 fills v6e MXU rows; multiple of 8 sublanes)


def _round_up(x, m):
    return ((x + m - 1) // m) * m


# ------------------------------- kernel ------------------------------------ #

def policy_net_kernel(x_ref, w1_ref, b1_ref, w2_ref, b2_ref, w3_ref, b3_ref,
                      out_ref):
    # LayerNorm over the feature (last) axis, biased variance like PyTorch.
    # The affine (ln_w, ln_b) is already folded into w1/b1.
    x = x_ref[...].astype(jnp.float32)
    mean = jnp.mean(x, axis=-1, keepdims=True)
    xc = x - mean
    var = jnp.mean(xc * xc, axis=-1, keepdims=True)
    xn = xc * jax.lax.rsqrt(var + LN_EPS)          # rsqrt -> EUP slot (free vs VALU)

    # Linear(state_dim, h1) + ReLU   (W1' = diag(ln_w) @ W1, b1' = ln_b @ W1 + b1)
    h1 = jnp.dot(xn, w1_ref[...], preferred_element_type=jnp.float32) + b1_ref[...]
    h1 = jnp.maximum(h1, 0.0)

    # Linear(h1, h2) + ReLU
    h2 = jnp.dot(h1, w2_ref[...], preferred_element_type=jnp.float32) + b2_ref[...]
    h2 = jnp.maximum(h2, 0.0)

    # Linear(h2, action_dim_padded)  -- lane-dense (128-wide) unmasked store
    y = jnp.dot(h2, w3_ref[...], preferred_element_type=jnp.float32) + b3_ref[...]
    out_ref[...] = y.astype(out_ref.dtype)


# ------------------------------ parameters --------------------------------- #

def init_policy_params(key, state_dim, action_dim, h1=64, h2=32, dtype=jnp.float32):
    """Deterministic init matching PyTorch: kaiming_uniform_(relu) weights, zero biases,
    LayerNorm weight=1 / bias=0. Linear weights returned as (in, out)."""
    def kaiming_uniform(k, fan_in, fan_out):
        bound = jnp.sqrt(6.0 / fan_in)          # gain=sqrt(2) -> bound = sqrt(6/fan_in)
        w = jax.random.uniform(k, (fan_out, fan_in), dtype, minval=-bound, maxval=bound)
        return w.T                               # (in, out)

    k1, k2, k3 = jax.random.split(key, 3)
    return {
        "ln_w": jnp.ones((1, state_dim), dtype),
        "ln_b": jnp.zeros((1, state_dim), dtype),
        "w1": kaiming_uniform(k1, state_dim, h1),
        "b1": jnp.zeros((1, h1), dtype),
        "w2": kaiming_uniform(k2, h1, h2),
        "b2": jnp.zeros((1, h2), dtype),
        "w3": kaiming_uniform(k3, h2, action_dim),
        "b3": jnp.zeros((1, action_dim), dtype),
    }


def prepare_fused_params(params):
    """Fold the LayerNorm affine into W1/b1 and lane-pad the output head to 128."""
    ln_w = params["ln_w"].astype(jnp.float32)              # (1, state_dim)
    ln_b = params["ln_b"].astype(jnp.float32)              # (1, state_dim)
    w1 = params["w1"].astype(jnp.float32)                  # (state_dim, h1)
    b1 = params["b1"].astype(jnp.float32)                  # (1, h1)

    w1_f = ln_w.reshape(-1, 1) * w1                        # diag(ln_w) @ W1
    b1_f = ln_b @ w1 + b1                                  # ln_b @ W1 + b1

    action_dim = params["w3"].shape[1]
    pad = (-action_dim) % LANE
    w3_p = jnp.pad(params["w3"].astype(jnp.float32), ((0, 0), (0, pad)))
    b3_p = jnp.pad(params["b3"].astype(jnp.float32), ((0, 0), (0, pad)))

    return {
        "w1": w1_f, "b1": b1_f,
        "w2": params["w2"].astype(jnp.float32), "b2": params["b2"].astype(jnp.float32),
        "w3": w3_p, "b3": b3_p,
        "action_dim": action_dim,
    }


# -------------------------------- wrapper ----------------------------------- #

def policy_net_forward(x, fused, max_tile_b=MAX_TILE_B):
    B, state_dim = x.shape
    action_dim = fused["action_dim"]
    out_pad = fused["w3"].shape[1]                          # multiple of 128

    # Batch tile: multiple of 8 (f32 sublanes), up to max_tile_b; pad B to a multiple.
    tile_b = min(max_tile_b, _round_up(B, 8))
    b_pad = _round_up(B, tile_b)
    xp = x if b_pad == B else jnp.pad(x, ((0, b_pad - B), (0, 0)))

    grid = (b_pad // tile_b,)
    x_spec = pl.BlockSpec((tile_b, state_dim), lambda i: (i, 0))
    out_spec = pl.BlockSpec((tile_b, out_pad), lambda i: (i, 0))

    def weight_spec(arr):
        # Full array as one block, constant index_map -> fetched once, VMEM-resident.
        return pl.BlockSpec(arr.shape, lambda i: (0, 0))

    out = pl.pallas_call(
        policy_net_kernel,
        out_shape=jax.ShapeDtypeStruct((b_pad, out_pad), x.dtype),
        grid=grid,
        in_specs=[x_spec,
                  weight_spec(fused["w1"]), weight_spec(fused["b1"]),
                  weight_spec(fused["w2"]), weight_spec(fused["b2"]),
                  weight_spec(fused["w3"]), weight_spec(fused["b3"])],
        out_specs=out_spec,
        compiler_params=pltpu.CompilerParams(dimension_semantics=("parallel",)),
    )(xp, fused["w1"], fused["b1"], fused["w2"], fused["b2"], fused["w3"], fused["b3"])

    # Slice away batch padding and zero-padded action lanes (so downstream
    # argmax/softmax over actions is unaffected by the padding).
    return out[:B, :action_dim]


# ------------------------------- reference ---------------------------------- #

def policy_net_ref(x, params):
    """Pure-JAX reference of the ORIGINAL (unfolded, unpadded) forward pass."""
    xf = x.astype(jnp.float32)
    mean = jnp.mean(xf, axis=-1, keepdims=True)
    var = jnp.mean((xf - mean) ** 2, axis=-1, keepdims=True)
    xn = (xf - mean) * jax.lax.rsqrt(var + LN_EPS)
    xn = xn * params["ln_w"] + params["ln_b"]
    h = jnp.maximum(xn @ params["w1"] + params["b1"], 0.0)
    h = jnp.maximum(h @ params["w2"] + params["b2"], 0.0)
    return (h @ params["w3"] + params["b3"]).astype(x.dtype)


if __name__ == "__main__":
    # PongBreak agent: small state vector, handful of discrete actions.
    B, state_dim, action_dim, h1, h2 = 8, 16, 6, 64, 32

    key = jax.random.PRNGKey(0)
    kx, kp, kg, kb = jax.random.split(key, 4)
    x = jax.random.normal(kx, (B, state_dim), dtype=jnp.float32)
    params = init_policy_params(kp, state_dim, action_dim, h1=h1, h2=h2)
    # Use a non-trivial LayerNorm affine so the W1/b1 folding is actually exercised
    # by the correctness check (PyTorch default init would make it an identity fold).
    params["ln_w"] = 1.0 + 0.1 * jax.random.normal(kg, (1, state_dim), jnp.float32)
    params["ln_b"] = 0.1 * jax.random.normal(kb, (1, state_dim), jnp.float32)

    fused = prepare_fused_params(params)

    out = policy_net_forward(x, fused)
    out = jax.block_until_ready(out)

    ref = policy_net_ref(x, params)
    assert out.shape == (B, action_dim)
    assert jnp.allclose(out, ref, atol=1e-4, rtol=1e-4), "mismatch vs reference"

    print("KERNEL_OK")
</pallas_src>

<mosaic_0001>
module attributes {stable_mosaic.version = 11 : i64} {
  func.func @policy_net_kernel(%arg0: i32, %arg1: memref<8x16xf32, #tpu.memory_space<vmem>>, %arg2: memref<16x64xf32, #tpu.memory_space<vmem>>, %arg3: memref<1x64xf32, #tpu.memory_space<vmem>>, %arg4: memref<64x32xf32, #tpu.memory_space<vmem>>, %arg5: memref<1x32xf32, #tpu.memory_space<vmem>>, %arg6: memref<32x128xf32, #tpu.memory_space<vmem>>, %arg7: memref<1x128xf32, #tpu.memory_space<vmem>>, %arg8: memref<8x128xf32, #tpu.memory_space<vmem>>) attributes {dimension_semantics = [#tpu.dimension_semantics<parallel>], iteration_bounds = array<i64: 1>, scalar_prefetch = 0 : i64, scratch_operands = 0 : i64, tpu.core_type = #tpu.core_type<tc>, window_params = [{transform_indices = @transform_0, window_bounds = array<i64: 8, 16>}, {pipeline_mode = #tpu.pipeline_mode<synchronous>, transform_indices = @transform_1, window_bounds = array<i64: 16, 64>}, {pipeline_mode = #tpu.pipeline_mode<synchronous>, transform_indices = @transform_2, window_bounds = array<i64: 1, 64>}, {pipeline_mode = #tpu.pipeline_mode<synchronous>, transform_indices = @transform_3, window_bounds = array<i64: 64, 32>}, {pipeline_mode = #tpu.pipeline_mode<synchronous>, transform_indices = @transform_4, window_bounds = array<i64: 1, 32>}, {pipeline_mode = #tpu.pipeline_mode<synchronous>, transform_indices = @transform_5, window_bounds = array<i64: 32, 128>}, {pipeline_mode = #tpu.pipeline_mode<synchronous>, transform_indices = @transform_6, window_bounds = array<i64: 1, 128>}, {transform_indices = @transform_7, window_bounds = array<i64: 8, 128>}]} {
    %c0 = arith.constant 0 : index
    %c0_0 = arith.constant 0 : index
    %0 = vector.load %arg1[%c0, %c0_0] : memref<8x16xf32, #tpu.memory_space<vmem>>, vector<8x16xf32>
    %cst = arith.constant dense<0.000000e+00> : vector<8xf32>
    %1 = vector.multi_reduction <add>, %0, %cst [1] : vector<8x16xf32> to vector<8xf32>
    %2 = vector.shape_cast %1 : vector<8xf32> to vector<8x1xf32>
    %cst_1 = arith.constant 1.600000e+01 : f32
    %3 = vector.broadcast %cst_1 : f32 to vector<8x1xf32>
    %4 = arith.divf %2, %3 : vector<8x1xf32>
    %5 = vector.broadcast %4 : vector<8x1xf32> to vector<8x16xf32>
    %6 = arith.subf %0, %5 : vector<8x16xf32>
    %7 = arith.mulf %6, %6 : vector<8x16xf32>
    %cst_2 = arith.constant dense<0.000000e+00> : vector<8xf32>
    %8 = vector.multi_reduction <add>, %7, %cst_2 [1] : vector<8x16xf32> to vector<8xf32>
    %9 = vector.shape_cast %8 : vector<8xf32> to vector<8x1xf32>
    %cst_3 = arith.constant 1.600000e+01 : f32
    %10 = vector.broadcast %cst_3 : f32 to vector<8x1xf32>
    %11 = arith.divf %9, %10 : vector<8x1xf32>
    %cst_4 = arith.constant 9.99999974E-6 : f32
    %12 = vector.broadcast %cst_4 : f32 to vector<8x1xf32>
    %13 = arith.addf %11, %12 : vector<8x1xf32>
    %14 = math.rsqrt %13 : vector<8x1xf32>
    %15 = vector.broadcast %14 : vector<8x1xf32> to vector<8x16xf32>
    %16 = arith.mulf %6, %15 : vector<8x16xf32>
    %c0_5 = arith.constant 0 : index
    %c0_6 = arith.constant 0 : index
    %17 = vector.load %arg2[%c0_5, %c0_6] : memref<16x64xf32, #tpu.memory_space<vmem>>, vector<16x64xf32>
    %cst_7 = arith.constant dense<0.000000e+00> : vector<8x64xf32>
    %18 = tpu.matmul %16, %17, %cst_7 {dimension_numbers = #tpu.dot_dimension_numbers<[1], [0], [0], [1], [0, 0, 1, 1], [], []>} : vector<8x16xf32>, vector<16x64xf32>, vector<8x64xf32> -> vector<8x64xf32>
    %c0_8 = arith.constant 0 : index
    %c0_9 = arith.constant 0 : index
    %19 = vector.load %arg3[%c0_8, %c0_9] : memref<1x64xf32, #tpu.memory_space<vmem>>, vector<1x64xf32>
    %20 = vector.broadcast %19 : vector<1x64xf32> to vector<8x64xf32>
    %21 = arith.addf %18, %20 : vector<8x64xf32>
    %cst_10 = arith.constant 0.000000e+00 : f32
    %22 = vector.broadcast %cst_10 : f32 to vector<8x64xf32>
    %23 = arith.maximumf %21, %22 : vector<8x64xf32>
    %c0_11 = arith.constant 0 : index
    %c0_12 = arith.constant 0 : index
    %24 = vector.load %arg4[%c0_11, %c0_12] : memref<64x32xf32, #tpu.memory_space<vmem>>, vector<64x32xf32>
    %cst_13 = arith.constant dense<0.000000e+00> : vector<8x32xf32>
    %25 = tpu.matmul %23, %24, %cst_13 {dimension_numbers = #tpu.dot_dimension_numbers<[1], [0], [0], [1], [0, 0, 1, 1], [], []>} : vector<8x64xf32>, vector<64x32xf32>, vector<8x32xf32> -> vector<8x32xf32>
    %c0_14 = arith.constant 0 : index
    %c0_15 = arith.constant 0 : index
    %26 = vector.load %arg5[%c0_14, %c0_15] : memref<1x32xf32, #tpu.memory_space<vmem>>, vector<1x32xf32>
    %27 = vector.broadcast %26 : vector<1x32xf32> to vector<8x32xf32>
    %28 = arith.addf %25, %27 : vector<8x32xf32>
    %cst_16 = arith.constant 0.000000e+00 : f32
    %29 = vector.broadcast %cst_16 : f32 to vector<8x32xf32>
    %30 = arith.maximumf %28, %29 : vector<8x32xf32>
    %c0_17 = arith.constant 0 : index
    %c0_18 = arith.constant 0 : index
    %31 = vector.load %arg6[%c0_17, %c0_18] : memref<32x128xf32, #tpu.memory_space<vmem>>, vector<32x128xf32>
    %cst_19 = arith.constant dense<0.000000e+00> : vector<8x128xf32>
    %32 = tpu.matmul %30, %31, %cst_19 {dimension_numbers = #tpu.dot_dimension_numbers<[1], [0], [0], [1], [0, 0, 1, 1], [], []>} : vector<8x32xf32>, vector<32x128xf32>, vector<8x128xf32> -> vector<8x128xf32>
    %c0_20 = arith.constant 0 : index
    %c0_21 = arith.constant 0 : index
    %33 = vector.load %arg7[%c0_20, %c0_21] : memref<1x128xf32, #tpu.memory_space<vmem>>, vector<1x128xf32>
    %34 = vector.broadcast %33 : vector<1x128xf32> to vector<8x128xf32>
    %35 = arith.addf %32, %34 : vector<8x128xf32>
    %c0_22 = arith.constant 0 : index
    %c0_23 = arith.constant 0 : index
    %36 = vector.load %arg8[%c0_22, %c0_23] : memref<8x128xf32, #tpu.memory_space<vmem>>, vector<8x128xf32>
    tpu.vector_store %arg8[%c0_22, %c0_23], %35 {strides = array<i32>} : memref<8x128xf32, #tpu.memory_space<vmem>>, vector<8x128xf32>,
    return
  }
  func.func @transform_0(%arg0: i32) -> (i32, i32) {
    %c0_i32 = arith.constant 0 : i32
    %c0_i32_0 = arith.constant 0 : i32
    return %arg0, %c0_i32 : i32, i32
  }
  func.func @transform_1(%arg0: i32) -> (i32, i32) {
    %c0_i32 = arith.constant 0 : i32
    %c0_i32_0 = arith.constant 0 : i32
    %c0_i32_1 = arith.constant 0 : i32
    return %c0_i32, %c0_i32_0 : i32, i32
  }
  func.func @transform_2(%arg0: i32) -> (i32, i32) {
    %c0_i32 = arith.constant 0 : i32
    %c0_i32_0 = arith.constant 0 : i32
    %c0_i32_1 = arith.constant 0 : i32
    return %c0_i32, %c0_i32_0 : i32, i32
  }
  func.func @transform_3(%arg0: i32) -> (i32, i32) {
    %c0_i32 = arith.constant 0 : i32
    %c0_i32_0 = arith.constant 0 : i32
    %c0_i32_1 = arith.constant 0 : i32
    return %c0_i32, %c0_i32_0 : i32, i32
  }
  func.func @transform_4(%arg0: i32) -> (i32, i32) {
    %c0_i32 = arith.constant 0 : i32
    %c0_i32_0 = arith.constant 0 : i32
    %c0_i32_1 = arith.constant 0 : i32
    return %c0_i32, %c0_i32_0 : i32, i32
  }
  func.func @transform_5(%arg0: i32) -> (i32, i32) {
    %c0_i32 = arith.constant 0 : i32
    %c0_i32_0 = arith.constant 0 : i32
    %c0_i32_1 = arith.constant 0 : i32
    return %c0_i32, %c0_i32_0 : i32, i32
  }
  func.func @transform_6(%arg0: i32) -> (i32, i32) {
    %c0_i32 = arith.constant 0 : i32
    %c0_i32_0 = arith.constant 0 : i32
    %c0_i32_1 = arith.constant 0 : i32
    return %c0_i32, %c0_i32_0 : i32, i32
  }
  func.func @transform_7(%arg0: i32) -> (i32, i32) {
    %c0_i32 = arith.constant 0 : i32
    %c0_i32_0 = arith.constant 0 : i32
    return %arg0, %c0_i32 : i32, i32
  }
}

</mosaic_0001>

<llo_original>
// kernel: tpu_custom_call.1
$region0: #{tpu_custom_call.1}
  #allocation0 [shape = 'u32[]', space=smem, size = 0x4, offset = 0x4, fixed_abs, tag = 'smem constant byte address 0x4 - core index']
  #allocation1 [shape = 'u32[144,128]{1,0:T(1,128)}', space=vmem, size = 0x12000, scoped, tag = 'internal scratch']
  %s0 = inlined_call_operand.vmem [shape: f32[8,16], index: 0, kind: input, shape index: {}]
  %s1 = inlined_call_operand.vmem [shape: f32[16,64], index: 1, kind: input, shape index: {}]
  %s2 = inlined_call_operand.vmem [shape: f32[1,64], index: 2, kind: input, shape index: {}]
  %s3 = inlined_call_operand.vmem [shape: f32[64,32], index: 3, kind: input, shape index: {}]
  %s4 = inlined_call_operand.vmem [shape: f32[1,32], index: 4, kind: input, shape index: {}]
  %s5 = inlined_call_operand.vmem [shape: f32[32,128], index: 5, kind: input, shape index: {}]
  %s6 = inlined_call_operand.vmem [shape: f32[1,128], index: 6, kind: input, shape index: {}]
  %s7 = inlined_call_operand.hbm [shape: f32[8,128], index: 7, kind: output, shape index: {}]
  %s8 = sld [smem:[#allocation0]]
  $region38: #{tpu_custom_call.1} parent=0
    _
  %s10 = ssub.s32 1, %s8
  %s11 = scalar_select 0, %s10, %s8
  $region1: #{tpu_custom_call.1} parent=0
    #allocation2 [shape = 'u8[4096]{0}', space=vmem, size = 0x1000, scoped, tag = 'output window, operand 0, single buffered']
    #allocation3 [shape = 's32[1]{0}', space=sflag, size = 0x4, scoped, tag = 'scoped memory for tpu_custom_call.1']
    %12 = vsyncpa [#allocation3], 0
    // Predicated region
    $region2: #{tpu_custom_call.1} parent=1 // pred_check
      _
    $region3: #{tpu_custom_call.1} parent=1 // pred_check_branch
      %14 = sbr.rel (0) target = $region5
    $region4: #{tpu_custom_call.1} parent=1 // pred_region
      _
    $region5: #{tpu_custom_call.1} parent=1 // pred_fallthru
      _
    // Predicated region
    $region6: #{tpu_custom_call.1} parent=1 // pred_check
      _
    $region7: #{tpu_custom_call.1} parent=1 // pred_check_branch
      %16 = sbr.rel (0) target = $region9
    $region8: #{tpu_custom_call.1} parent=1 // pred_region
      _
    $region9: #{tpu_custom_call.1} parent=1 // pred_fallthru
      _
    // Predicated region
    $region10: #{tpu_custom_call.1} parent=1 // pred_check
      _
    $region11: #{tpu_custom_call.1} parent=1 // pred_check_branch
      %18 = sbr.rel (0) target = $region13
    $region12: #{tpu_custom_call.1} parent=1 // pred_region
      _
    $region13: #{tpu_custom_call.1} parent=1 // pred_fallthru
      _
    // Predicated region
    $region14: #{tpu_custom_call.1} parent=1 // pred_check
      _
    $region15: #{tpu_custom_call.1} parent=1 // pred_check_branch
      %20 = sbr.rel (0) target = $region17
    $region16: #{tpu_custom_call.1} parent=1 // pred_region
      _
    $region17: #{tpu_custom_call.1} parent=1 // pred_fallthru
      _
    // Predicated region
    $region18: #{tpu_custom_call.1} parent=1 // pred_check
      _
    $region19: #{tpu_custom_call.1} parent=1 // pred_check_branch
      %22 = sbr.rel (0) target = $region21
    $region20: #{tpu_custom_call.1} parent=1 // pred_region
      _
    $region21: #{tpu_custom_call.1} parent=1 // pred_fallthru
      _
    // Predicated region
    $region22: #{tpu_custom_call.1} parent=1 // pred_check
      _
    $region23: #{tpu_custom_call.1} parent=1 // pred_check_branch
      %24 = sbr.rel (0) target = $region25
    $region24: #{tpu_custom_call.1} parent=1 // pred_region
      _
    $region25: #{tpu_custom_call.1} parent=1 // pred_fallthru
      _
    // Predicated region
    $region26: #{tpu_custom_call.1} parent=1 // pred_check
      _
    $region27: #{tpu_custom_call.1} parent=1 // pred_check_branch
      %26 = sbr.rel (0) target = $region29
    $region28: #{tpu_custom_call.1} parent=1 // pred_region
      _
    $region29: #{tpu_custom_call.1} parent=1 // pred_fallthru
      _
    %v27 = vld [vmem:[%s0] sm:$0xff]
    %vm28 = vcmask 130048
    %v29 = vsel %vm28, %v27, 0.0
    %30 = vadd.xlane.f32.xlu0 %v29
    %v31 = vpop.xlane.xlu0 %30
    %v32 = vrcp.pop 16.0
    %v33 = vmul.f32 %v31, %v32
    %v34 = vsub.f32 %v27, %v33
    %v35 = vmul.f32 %v34, %v34
    %v36 = vsel %vm28, %v35, 0.0
    %37 = vadd.xlane.f32.xlu0 %v36
    %v38 = vpop.xlane.xlu0 %37
    %v39 = vmul.f32 %v38, %v32
    %v40 = vadd.f32 %v39, 1e-05
    %v41 = vrsqrt.pop %v40
    %v42 = vmul.f32 %v34, %v41
    %v43 = vld [vmem:[%s1] sm:$0xff]
    %v44 = vld [vmem:[%s1 + $0x8] sm:$0xff]
    %v45 = vld [vmem:[%s2] sm:$0x1]
    %v47 = vlaneseq
    %v48 = vshrl.u32 %v47, 7
    %v49 = vsub.s32 0, %v48
    %v50 = vrot.slane %v45, %v49
    %v53 = vsel %vm28, %v42, 0
    %55 = vmatprep.subr.mxu0 0.0
    %56 = vmatpush1.msra.mxu0 %v43
    %57 = vmatprep.subr.mxu0 0.0
    %58 = vmatpush1.msra.mxu0 %v44
    %59 = vmatprep.subr.mxu0 0.0
    %60 = vmatpush1.msra.mxu0 0.0
    %61 = vmatprep.subr.mxu0 0.0
    %62 = vmatpush1.msra.mxu0 0.0
    %63 = vmatprep.subr.mxu0 0.0
    %64 = vmatpush1.msra.mxu0 0.0
    %65 = vmatprep.subr.mxu0 0.0
    %66 = vmatpush1.msra.mxu0 0.0
    %67 = vmatprep.subr.mxu0 0.0
    %68 = vmatpush1.msra.mxu0 0.0
    %69 = vmatprep.subr.mxu0 0.0
    %70 = vmatpush1.msra.mxu0 0.0
    %71 = vmatprep.subr.mxu0 0.0
    %72 = vmatpush1.msra.mxu0 0.0
    %73 = vmatprep.subr.mxu0 0.0
    %74 = vmatpush1.msra.mxu0 0.0
    %75 = vmatprep.subr.mxu0 0.0
    %76 = vmatpush1.msra.mxu0 0.0
    %77 = vmatprep.subr.mxu0 0.0
    %78 = vmatpush1.msra.mxu0 0.0
    %79 = vmatprep.subr.mxu0 0.0
    %80 = vmatpush1.msra.mxu0 0.0
    %81 = vmatprep.subr.mxu0 0.0
    %82 = vmatpush1.msra.mxu0 0.0
    %83 = vmatprep.subr.mxu0 0.0
    %84 = vmatpush1.msra.mxu0 0.0
    %85 = vmatprep.subr.mxu0 0.0
    %86 = vmatpush1.msra.mxu0 0.0
    %87 = vmatprep.subr.mxu0 0.0
    %88 = vmatpush1.msra.mxu0 0.0
    %89 = vmatprep.subr.mxu0 0.0
    %90 = vmatpush1.msra.mxu0 0.0
    %91 = vmatprep.subr.mxu0 0.0
    %92 = vmatpush1.msra.mxu0 0.0
    %93 = vmatprep.subr.mxu0 0.0
    %94 = vmatpush1.msra.mxu0 0.0
    %95 = vmatprep.subr.mxu0 0.0
    %96 = vmatpush1.msra.mxu0 0.0
    %97 = vmatprep.subr.mxu0 0.0
    %98 = vmatpush1.msra.mxu0 0.0
    %99 = vmatprep.subr.mxu0 0.0
    %100 = vmatpush1.msra.mxu0 0.0
    %101 = vmatprep.subr.mxu0 0.0
    %102 = vmatpush1.msra.mxu0 0.0
    %103 = vmatprep.subr.mxu0 0.0
    %104 = vmatpush1.msra.mxu0 0.0
    %105 = vmatprep.subr.mxu0 0.0
    %106 = vmatpush1.msra.mxu0 0.0
    %107 = vmatprep.subr.mxu0 0.0
    %108 = vmatpush1.msra.mxu0 0.0
    %109 = vmatprep.subr.mxu0 0.0
    %110 = vmatpush1.msra.mxu0 0.0
    %111 = vmatprep.subr.mxu0 0.0
    %112 = vmatpush1.msra.mxu0 0.0
    %113 = vmatprep.subr.mxu0 0.0
    %114 = vmatpush1.msra.mxu0 0.0
    %115 = vmatprep.subr.mxu0 0.0
    %116 = vmatpush1.msra.mxu0 0.0
    %117 = vmatprep.subr.mxu0 0.0
    %118 = vmatpush1.msra.mxu0 0.0
    %119 = vmatprep.mubr.f32.mxu0 0.0
    %120 = vmatmul.mubr.f32.gmra.mrb[0].mxu0 %v53
    %v121 = vpop.f32.mrb[0].mxu0
    %v122 = vadd.f32 %v50, %v121
    %v123 = vpop.f32.mrb[0].mxu0
    %124 = vdwg.mxu0
    %v125 = vmax.f32 %v122, 0.0
    %v126 = vld [vmem:[%s3] sm:$0xff]
    %v127 = vld [vmem:[%s3 + $0x8] sm:$0xff]
    %v128 = vld [vmem:[%s3 + $0x10] sm:$0xff]
    %v129 = vld [vmem:[%s3 + $0x18] sm:$0xff]
    %v130 = vld [vmem:[%s3 + $0x20] sm:$0xff]
    %v131 = vld [vmem:[%s3 + $0x28] sm:$0xff]
    %v132 = vld [vmem:[%s3 + $0x30] sm:$0xff]
    %v133 = vld [vmem:[%s3 + $0x38] sm:$0xff]
    %v134 = vld [vmem:[%s4] sm:$0x1]
    %v136 = vlaneseq
    %v137 = vshrl.u32 %v136, 7
    %v138 = vsub.s32 0, %v137
    %v139 = vrot.slane %v134, %v138
    %vm141 = vcmask 523264
    %v143 = vsel %vm141, %v125, 0
    %145 = vmatprep.subr.mxu0 0.0
    %146 = vmatpush1.msra.mxu0 %v126
    %147 = vmatprep.subr.mxu0 0.0
    %148 = vmatpush1.msra.mxu0 %v127
    %149 = vmatprep.subr.mxu0 0.0
    %150 = vmatpush1.msra.mxu0 %v128
    %151 = vmatprep.subr.mxu0 0.0
    %152 = vmatpush1.msra.mxu0 %v129
    %153 = vmatprep.subr.mxu0 0.0
    %154 = vmatpush1.msra.mxu0 %v130
    %155 = vmatprep.subr.mxu0 0.0
    %156 = vmatpush1.msra.mxu0 %v131
    %157 = vmatprep.subr.mxu0 0.0
    %158 = vmatpush1.msra.mxu0 %v132
    %159 = vmatprep.subr.mxu0 0.0
    %160 = vmatpush1.msra.mxu0 %v133
    %161 = vmatprep.subr.mxu0 0.0
    %162 = vmatpush1.msra.mxu0 0.0
    %163 = vmatprep.subr.mxu0 0.0
    %164 = vmatpush1.msra.mxu0 0.0
    %165 = vmatprep.subr.mxu0 0.0
    %166 = vmatpush1.msra.mxu0 0.0
    %167 = vmatprep.subr.mxu0 0.0
    %168 = vmatpush1.msra.mxu0 0.0
    %169 = vmatprep.subr.mxu0 0.0
    %170 = vmatpush1.msra.mxu0 0.0
    %171 = vmatprep.subr.mxu0 0.0
    %172 = vmatpush1.msra.mxu0 0.0
    %173 = vmatprep.subr.mxu0 0.0
    %174 = vmatpush1.msra.mxu0 0.0
    %175 = vmatprep.subr.mxu0 0.0
    %176 = vmatpush1.msra.mxu0 0.0
    %177 = vmatprep.subr.mxu0 0.0
    %178 = vmatpush1.msra.mxu0 0.0
    %179 = vmatprep.subr.mxu0 0.0
    %180 = vmatpush1.msra.mxu0 0.0
    %181 = vmatprep.subr.mxu0 0.0
    %182 = vmatpush1.msra.mxu0 0.0
    %183 = vmatprep.subr.mxu0 0.0
    %184 = vmatpush1.msra.mxu0 0.0
    %185 = vmatprep.subr.mxu0 0.0
    %186 = vmatpush1.msra.mxu0 0.0
    %187 = vmatprep.subr.mxu0 0.0
    %188 = vmatpush1.msra.mxu0 0.0
    %189 = vmatprep.subr.mxu0 0.0
    %190 = vmatpush1.msra.mxu0 0.0
    %191 = vmatprep.subr.mxu0 0.0
    %192 = vmatpush1.msra.mxu0 0.0
    %193 = vmatprep.subr.mxu0 0.0
    %194 = vmatpush1.msra.mxu0 0.0
    %195 = vmatprep.subr.mxu0 0.0
    %196 = vmatpush1.msra.mxu0 0.0
    %197 = vmatprep.subr.mxu0 0.0
    %198 = vmatpush1.msra.mxu0 0.0
    %199 = vmatprep.subr.mxu0 0.0
    %200 = vmatpush1.msra.mxu0 0.0
    %201 = vmatprep.subr.mxu0 0.0
    %202 = vmatpush1.msra.mxu0 0.0
    %203 = vmatprep.subr.mxu0 0.0
    %204 = vmatpush1.msra.mxu0 0.0
    %205 = vmatprep.subr.mxu0 0.0
    %206 = vmatpush1.msra.mxu0 0.0
    %207 = vmatprep.subr.mxu0 0.0
    %208 = vmatpush1.msra.mxu0 0.0
    %209 = vmatprep.mubr.f32.mxu0 0.0
    %210 = vmatmul.mubr.f32.gmra.mrb[0].mxu0 %v143
    %v211 = vpop.f32.mrb[0].mxu0
    %v212 = vadd.f32 %v139, %v211
    %v213 = vpop.f32.mrb[0].mxu0
    %214 = vdwg.mxu0
    %v215 = vmax.f32 %v212, 0.0
    %v216 = vld [vmem:[%s5] sm:$0xff]
    %v217 = vld [vmem:[%s5 + $0x8] sm:$0xff]
    %v218 = vld [vmem:[%s5 + $0x10] sm:$0xff]
    %v219 = vld [vmem:[%s5 + $0x18] sm:$0xff]
    %v220 = vld [vmem:[%s6] sm:$0x1]
    %v222 = vlaneseq
    %v223 = vshrl.u32 %v222, 7
    %v224 = vsub.s32 0, %v223
    %v225 = vrot.slane %v220, %v224
    %vm227 = vcmask 261120
    %v229 = vsel %vm227, %v215, 0
    %231 = vmatprep.subr.mxu0 0.0
    %232 = vmatpush1.msra.mxu0 %v216
    %233 = vmatprep.subr.mxu0 0.0
    %234 = vmatpush1.msra.mxu0 %v217
    %235 = vmatprep.subr.mxu0 0.0
    %236 = vmatpush1.msra.mxu0 %v218
    %237 = vmatprep.subr.mxu0 0.0
    %238 = vmatpush1.msra.mxu0 %v219
    %239 = vmatprep.subr.mxu0 0.0
    %240 = vmatpush1.msra.mxu0 0.0
    %241 = vmatprep.subr.mxu0 0.0
    %242 = vmatpush1.msra.mxu0 0.0
    %243 = vmatprep.subr.mxu0 0.0
    %244 = vmatpush1.msra.mxu0 0.0
    %245 = vmatprep.subr.mxu0 0.0
    %246 = vmatpush1.msra.mxu0 0.0
    %247 = vmatprep.subr.mxu0 0.0
    %248 = vmatpush1.msra.mxu0 0.0
    %249 = vmatprep.subr.mxu0 0.0
    %250 = vmatpush1.msra.mxu0 0.0
    %251 = vmatprep.subr.mxu0 0.0
    %252 = vmatpush1.msra.mxu0 0.0
    %253 = vmatprep.subr.mxu0 0.0
    %254 = vmatpush1.msra.mxu0 0.0
    %255 = vmatprep.subr.mxu0 0.0
    %256 = vmatpush1.msra.mxu0 0.0
    %257 = vmatprep.subr.mxu0 0.0
    %258 = vmatpush1.msra.mxu0 0.0
    %259 = vmatprep.subr.mxu0 0.0
    %260 = vmatpush1.msra.mxu0 0.0
    %261 = vmatprep.subr.mxu0 0.0
    %262 = vmatpush1.msra.mxu0 0.0
    %263 = vmatprep.subr.mxu0 0.0
    %264 = vmatpush1.msra.mxu0 0.0
    %265 = vmatprep.subr.mxu0 0.0
    %266 = vmatpush1.msra.mxu0 0.0
    %267 = vmatprep.subr.mxu0 0.0
    %268 = vmatpush1.msra.mxu0 0.0
    %269 = vmatprep.subr.mxu0 0.0
    %270 = vmatpush1.msra.mxu0 0.0
    %271 = vmatprep.subr.mxu0 0.0
    %272 = vmatpush1.msra.mxu0 0.0
    %273 = vmatprep.subr.mxu0 0.0
    %274 = vmatpush1.msra.mxu0 0.0
    %275 = vmatprep.subr.mxu0 0.0
    %276 = vmatpush1.msra.mxu0 0.0
    %277 = vmatprep.subr.mxu0 0.0
    %278 = vmatpush1.msra.mxu0 0.0
    %279 = vmatprep.subr.mxu0 0.0
    %280 = vmatpush1.msra.mxu0 0.0
    %281 = vmatprep.subr.mxu0 0.0
    %282 = vmatpush1.msra.mxu0 0.0
    %283 = vmatprep.subr.mxu0 0.0
    %284 = vmatpush1.msra.mxu0 0.0
    %285 = vmatprep.subr.mxu0 0.0
    %286 = vmatpush1.msra.mxu0 0.0
    %287 = vmatprep.subr.mxu0 0.0
    %288 = vmatpush1.msra.mxu0 0.0
    %289 = vmatprep.subr.mxu0 0.0
    %290 = vmatpush1.msra.mxu0 0.0
    %291 = vmatprep.subr.mxu0 0.0
    %292 = vmatpush1.msra.mxu0 0.0
    %293 = vmatprep.subr.mxu0 0.0
    %294 = vmatpush1.msra.mxu0 0.0
    %295 = vmatprep.mubr.f32.mxu0 0.0
    %296 = vmatmul.mubr.f32.gmra.mrb[0].mxu0 %v229
    %v297 = vpop.f32.mrb[0].mxu0
    %v298 = vadd.f32 %v225, %v297
    %v299 = vpop.f32.mrb[0].mxu0
    %300 = vdwg.mxu0
    %301 = vst [vmem:[#allocation2] sm:$0xff] %v298
    // Predicated region
    $region30: #{tpu_custom_call.1} parent=1 // pred_check
      _
    $region31: #{tpu_custom_call.1} parent=1 // pred_check_branch
      %303 = sbr.rel (0) target = $region33
    $region32: #{tpu_custom_call.1} parent=1 // pred_region
      %s305 = ssub.s32 128, 128
      %306 = vsyncadd [#allocation3], %s305
      %s308 = sshll.u32 [#allocation2], 4
      %s309 = int_to_ptr.vmem [resolvable:$true] %s308
      %311 = dma.vmem_to_hbm [thread:$0]  %s309, 128, %s7, [#allocation3]
    $region33: #{tpu_custom_call.1} parent=1 // pred_fallthru
      _
    // Predicated region
    $region34: #{tpu_custom_call.1} parent=1 // pred_check
      _
    $region35: #{tpu_custom_call.1} parent=1 // pred_check_branch
      %313 = sbr.rel (0) target = $region37
    $region36: #{tpu_custom_call.1} parent=1 // pred_region
      %314 = dma.done [#allocation3], 128
    $region37: #{tpu_custom_call.1} parent=1 // pred_fallthru
      _
    %315 = vsyncpa [#allocation3], 1

</llo_original>
